<compile_context>
chip_gen: v5e
topology: v5e:2x2
jax: 0.10.0
libtpu: 0.0.40
codegen_flags: <defaults>
</compile_context>

<pallas_src>
import jax
import jax.numpy as jnp
from jax.experimental import pallas as pl
from jax.experimental.pallas import tpu as pltpu


def _round_up(x, m):
    return ((x + m - 1) // m) * m


def reg_l1_kernel(feat_ref, gidx_ref, tgt_ref, out_ref):
    """Grid = (batch_block, hw_tile). out_ref is resident across the hw axis."""
    t = pl.program_id(1)

    @pl.when(t == 0)
    def _():
        out_ref[...] = jnp.zeros_like(out_ref)

    feat = feat_ref[...]        # (Bb, HWT) f32 -- one spatial tile of the feature map
    gidx = gidx_ref[...]        # (Bb, K)   i32 -- composed flat spatial indices
    tgt = tgt_ref[...]          # (Bb, K)   f32 -- gathered regression targets

    Bb, HWT = feat.shape

    # Tile-local index; each (b, k) pair "hits" exactly one spatial tile.
    local = gidx - t * HWT                                   # (Bb, K) i32
    hit = (local >= 0) & (local < HWT)                       # (Bb, K) bool

    # Exact gather: lane-dense compare against a small (1, 1, HWT) iota,
    # select, lane-reduce (adding zeros is exact).
    hw_iota = jax.lax.broadcasted_iota(jnp.int32, (1, 1, HWT), 2)
    fmask = hw_iota == local[:, :, None]                     # (Bb, K, HWT) bool
    pred = jnp.sum(jnp.where(fmask, feat[:, None, :], 0.0), axis=2)  # (Bb, K)

    # Per-tile L1 contribution of the elements whose index lives in this tile.
    out_ref[...] += jnp.sum(jnp.where(hit, jnp.abs(pred - tgt), 0.0))


def reg_l1_loss(output, mask, ind, target, person_idx):
    """Pallas implementation of RegL1Loss.forward. `mask` is unused (as in torch)."""
    del mask  # accepted but unused, matching the reference module
    B, C, H, W = output.shape
    assert C == 1, "squeeze(2) in the reference module implies a single channel"
    HW = H * W
    K = person_idx.shape[1]

    pidx = person_idx.astype(jnp.int32)
    # Hoisted index composition: tiny XLA gathers, keeps the hot kernel simple.
    gidx = jnp.take_along_axis(ind.astype(jnp.int32), pidx, axis=1)          # (B, K)
    tgt_g = jnp.take_along_axis(target[..., 0].astype(jnp.float32),
                                pidx, axis=1)                                # (B, K)
    feat = output.reshape(B, HW).astype(jnp.float32)                          # (B, HW)

    # --- tiling ---------------------------------------------------------------
    Bb = 8                                    # full sublanes per batch block
    LANE = 128
    HWT = min(2048, _round_up(HW, LANE))      # lane-dense spatial tile
    HW_pad = _round_up(HW, HWT)
    B_pad = _round_up(B, Bb)

    # Zero padding: padded rows have feat == 0, gidx == 0, tgt == 0 -> |0-0| = 0.
    # Padded spatial positions (>= HW) never match any gidx, so they add zeros.
    feat = jnp.pad(feat, ((0, B_pad - B), (0, HW_pad - HW)))
    gidx = jnp.pad(gidx, ((0, B_pad - B), (0, 0)))
    tgt_g = jnp.pad(tgt_g, ((0, B_pad - B), (0, 0)))

    nb = B_pad // Bb
    nt = HW_pad // HWT

    partials = pl.pallas_call(
        reg_l1_kernel,
        out_shape=jax.ShapeDtypeStruct((nb, 1), jnp.float32),
        grid=(nb, nt),
        in_specs=[
            pl.BlockSpec((Bb, HWT), lambda b, t: (b, t)),   # feat spatial tile
            pl.BlockSpec((Bb, K), lambda b, t: (b, 0)),     # gidx (resident per b)
            pl.BlockSpec((Bb, K), lambda b, t: (b, 0)),     # tgt  (resident per b)
        ],
        # Output block index ignores t -> resident accumulator over the hw axis,
        # one writeback per batch block.
        out_specs=pl.BlockSpec((1, 1), lambda b, t: (b, 0)),
        compiler_params=pltpu.CompilerParams(
            dimension_semantics=("parallel", "arbitrary")),
    )(feat, gidx, tgt_g)

    return jnp.sum(partials)


def reg_l1_loss_ref(output, mask, ind, target, person_idx):
    """Pure-JAX reference matching the PyTorch module."""
    del mask
    B, C, H, W = output.shape
    feat = jnp.transpose(output, (0, 2, 3, 1)).reshape(B, H * W, C)
    g_ind = jnp.take_along_axis(ind, person_idx, axis=1)                   # (B, K)
    pred = jnp.take_along_axis(feat, g_ind[:, :, None], axis=1)[..., 0]    # (B, K)
    tgt = jnp.take_along_axis(target[..., 0], person_idx, axis=1)          # (B, K)
    return jnp.sum(jnp.abs(pred - tgt))


if __name__ == "__main__":
    # RegL1Loss has no learnable parameters, so nothing to initialize.
    B, C, H, W = 2, 1, 16, 16   # NCHW; C must be 1 (squeeze(2) in the reference)
    M, K = 16, 8                # max object slots / selected person indices

    key = jax.random.PRNGKey(0)
    k0, k1, k2, k3 = jax.random.split(key, 4)

    output = jax.random.normal(k0, (B, C, H, W), dtype=jnp.float32)
    mask = jnp.ones((B, M), dtype=jnp.float32)                      # unused
    ind = jax.random.randint(k1, (B, M), 0, H * W, dtype=jnp.int32)
    target = jax.random.normal(k2, (B, M, 1), dtype=jnp.float32)
    person_idx = jax.random.randint(k3, (B, K), 0, M, dtype=jnp.int32)

    loss = jax.block_until_ready(
        reg_l1_loss(output, mask, ind, target, person_idx))
    loss_ref = jax.block_until_ready(
        reg_l1_loss_ref(output, mask, ind, target, person_idx))

    assert jnp.allclose(loss, loss_ref, rtol=1e-5, atol=1e-5), (loss, loss_ref)
    print("KERNEL_OK")
</pallas_src>

<mosaic_0001>
module attributes {stable_mosaic.version = 11 : i64} {
  func.func @reg_l1_kernel(%arg0: i32, %arg1: i32, %arg2: memref<8x256xf32, #tpu.memory_space<vmem>>, %arg3: memref<8x8xi32, #tpu.memory_space<vmem>>, %arg4: memref<8x8xf32, #tpu.memory_space<vmem>>, %arg5: memref<1x1xf32, #tpu.memory_space<vmem>>) attributes {dimension_semantics = [#tpu.dimension_semantics<parallel>, #tpu.dimension_semantics<arbitrary>], iteration_bounds = array<i64: 1, 1>, scalar_prefetch = 0 : i64, scratch_operands = 0 : i64, tpu.core_type = #tpu.core_type<tc>, window_params = [{transform_indices = @transform_0, window_bounds = array<i64: 8, 256>}, {transform_indices = @transform_1, window_bounds = array<i64: 8, 8>}, {transform_indices = @transform_2, window_bounds = array<i64: 8, 8>}, {transform_indices = @transform_3, window_bounds = array<i64: 1, 1>}]} {
    %c0_i32 = arith.constant 0 : i32
    %0 = arith.cmpi eq, %arg1, %c0_i32 : i32
    %1 = arith.extui %0 : i1 to i32
    %c0_i32_0 = arith.constant 0 : i32
    %2 = arith.cmpi ne, %1, %c0_i32_0 : i32
    scf.if %2 {
      %cst_15 = arith.constant 0.000000e+00 : f32
      %37 = vector.broadcast %cst_15 : f32 to vector<1x1xf32>
      %c0_16 = arith.constant 0 : index
      %c0_17 = arith.constant 0 : index
      %38 = vector.load %arg5[%c0_16, %c0_17] : memref<1x1xf32, #tpu.memory_space<vmem>>, vector<1x1xf32>
      tpu.vector_store %arg5[%c0_16, %c0_17], %37 {strides = array<i32>} : memref<1x1xf32, #tpu.memory_space<vmem>>, vector<1x1xf32>,
    } else {
    }
    %c0 = arith.constant 0 : index
    %c0_1 = arith.constant 0 : index
    %3 = vector.load %arg2[%c0, %c0_1] : memref<8x256xf32, #tpu.memory_space<vmem>>, vector<8x256xf32>
    %c0_2 = arith.constant 0 : index
    %c0_3 = arith.constant 0 : index
    %4 = vector.load %arg3[%c0_2, %c0_3] : memref<8x8xi32, #tpu.memory_space<vmem>>, vector<8x8xi32>
    %c0_4 = arith.constant 0 : index
    %c0_5 = arith.constant 0 : index
    %5 = vector.load %arg4[%c0_4, %c0_5] : memref<8x8xf32, #tpu.memory_space<vmem>>, vector<8x8xf32>
    %c256_i32 = arith.constant 256 : i32
    %6 = arith.muli %arg1, %c256_i32 : i32
    %7 = vector.broadcast %6 : i32 to vector<8x8xi32>
    %8 = arith.subi %4, %7 : vector<8x8xi32>
    %c0_i32_6 = arith.constant 0 : i32
    %9 = vector.broadcast %c0_i32_6 : i32 to vector<8x8xi32>
    %10 = arith.cmpi sge, %8, %9 : vector<8x8xi32>
    %c256_i32_7 = arith.constant 256 : i32
    %11 = vector.broadcast %c256_i32_7 : i32 to vector<8x8xi32>
    %12 = arith.cmpi slt, %8, %11 : vector<8x8xi32>
    %13 = arith.andi %10, %12 : vector<8x8xi1>
    %14 = tpu.iota {dimensions = array<i32: 2>} : vector<1x1x256xi32>
    %15 = vector.shape_cast %8 : vector<8x8xi32> to vector<8x8x1xi32>
    %16 = vector.broadcast %14 : vector<1x1x256xi32> to vector<8x8x256xi32>
    %17 = vector.broadcast %15 : vector<8x8x1xi32> to vector<8x8x256xi32>
    %18 = arith.cmpi eq, %16, %17 : vector<8x8x256xi32>
    %19 = vector.shape_cast %3 : vector<8x256xf32> to vector<8x1x256xf32>
    %cst = arith.constant 0.000000e+00 : f32
    %20 = vector.shape_cast %19 : vector<8x1x256xf32> to vector<8x1x256xf32>
    %21 = vector.broadcast %20 : vector<8x1x256xf32> to vector<8x8x256xf32>
    %22 = vector.broadcast %cst : f32 to vector<8x8x256xf32>
    %23 = arith.select %18, %21, %22 : vector<8x8x256xi1>, vector<8x8x256xf32>
    %cst_8 = arith.constant dense<0.000000e+00> : vector<8x8xf32>
    %24 = vector.multi_reduction <add>, %23, %cst_8 [2] : vector<8x8x256xf32> to vector<8x8xf32>
    %c0_9 = arith.constant 0 : index
    %c0_10 = arith.constant 0 : index
    %25 = vector.load %arg5[%c0_9, %c0_10] : memref<1x1xf32, #tpu.memory_space<vmem>>, vector<1x1xf32>
    %26 = arith.subf %24, %5 : vector<8x8xf32>
    %27 = math.absf %26 : vector<8x8xf32>
    %cst_11 = arith.constant 0.000000e+00 : f32
    %28 = vector.broadcast %cst_11 : f32 to vector<8x8xf32>
    %29 = arith.select %13, %27, %28 : vector<8x8xi1>, vector<8x8xf32>
    %30 = vector.shape_cast %29 : vector<8x8xf32> to vector<1x8x8xf32>
    %cst_12 = arith.constant dense<0.000000e+00> : vector<1xf32>
    %31 = vector.multi_reduction <add>, %30, %cst_12 [1, 2] : vector<1x8x8xf32> to vector<1xf32>
    %32 = vector.shape_cast %31 : vector<1xf32> to vector<1x1x1xf32>
    %33 = vector.extract %32[0, 0, 0] : f32 from vector<1x1x1xf32>
    %34 = vector.broadcast %33 : f32 to vector<1x1xf32>
    %35 = arith.addf %25, %34 : vector<1x1xf32>
    %c0_13 = arith.constant 0 : index
    %c0_14 = arith.constant 0 : index
    %36 = vector.load %arg5[%c0_13, %c0_14] : memref<1x1xf32, #tpu.memory_space<vmem>>, vector<1x1xf32>
    tpu.vector_store %arg5[%c0_13, %c0_14], %35 {strides = array<i32>} : memref<1x1xf32, #tpu.memory_space<vmem>>, vector<1x1xf32>,
    return
  }
  func.func @transform_0(%arg0: i32, %arg1: i32) -> (i32, i32) {
    %c0_i32 = arith.constant 0 : i32
    return %arg0, %arg1 : i32, i32
  }
  func.func @transform_1(%arg0: i32, %arg1: i32) -> (i32, i32) {
    %c0_i32 = arith.constant 0 : i32
    %c0_i32_0 = arith.constant 0 : i32
    return %arg0, %c0_i32 : i32, i32
  }
  func.func @transform_2(%arg0: i32, %arg1: i32) -> (i32, i32) {
    %c0_i32 = arith.constant 0 : i32
    %c0_i32_0 = arith.constant 0 : i32
    return %arg0, %c0_i32 : i32, i32
  }
  func.func @transform_3(%arg0: i32, %arg1: i32) -> (i32, i32) {
    %c0_i32 = arith.constant 0 : i32
    %c0_i32_0 = arith.constant 0 : i32
    return %arg0, %c0_i32 : i32, i32
  }
}

</mosaic_0001>

<llo_original>
// kernel: tpu_custom_call.1
$region0: #{tpu_custom_call.1}
  #allocation0 [shape = 'u32[]', space=smem, size = 0x4, offset = 0x4, fixed_abs, tag = 'smem constant byte address 0x4 - core index']
  #allocation1 [shape = 'u32[72,128]{1,0:T(1,128)}', space=vmem, size = 0x9000, scoped, tag = 'internal scratch']
  %s0 = inlined_call_operand.hbm [shape: f32[8,256], index: 0, kind: input, shape index: {}]
  %s1 = inlined_call_operand.hbm [shape: s32[8,8], index: 1, kind: input, shape index: {}]
  %s2 = inlined_call_operand.hbm [shape: f32[8,8], index: 2, kind: input, shape index: {}]
  %s3 = inlined_call_operand.hbm [shape: f32[1,1], index: 3, kind: output, shape index: {}]
  %s4 = sld [smem:[#allocation0]]
  $region38: #{tpu_custom_call.1} parent=0
    _
  %s6 = ssub.s32 1, %s4
  %s7 = scalar_select 0, %s6, %s4
  $region1: #{tpu_custom_call.1} parent=0
    #allocation2 [shape = 'u8[8192]{0}', space=vmem, size = 0x2000, scoped, tag = 'input window, operand 0, single buffered']
    #allocation3 [shape = 's32[1]{0}', space=sflag, size = 0x4, scoped, tag = 'scoped memory for tpu_custom_call.1']
    #allocation4 [shape = 's32[1]{0}', space=sflag, size = 0x4, scoped, tag = 'scoped memory for tpu_custom_call.1']
    #allocation5 [shape = 'u8[4096]{0}', space=vmem, size = 0x1000, scoped, tag = 'input window, operand 1, single buffered']
    #allocation6 [shape = 's32[1]{0}', space=sflag, size = 0x4, scoped, tag = 'scoped memory for tpu_custom_call.1']
    #allocation7 [shape = 'u8[4096]{0}', space=vmem, size = 0x1000, scoped, tag = 'input window, operand 2, single buffered']
    #allocation8 [shape = 'u8[512]{0}', space=vmem, size = 0x400, scoped, tag = 'output window, operand 0, single buffered']
    %8 = vsyncpa [#allocation3], 0
    %9 = vsyncpa [#allocation6], 0
    %10 = vsyncpa [#allocation4], 0
    // Predicated region
    $region2: #{tpu_custom_call.1} parent=1 // pred_check
      _
    $region3: #{tpu_custom_call.1} parent=1 // pred_check_branch
      %12 = sbr.rel (0) target = $region5
    $region4: #{tpu_custom_call.1} parent=1 // pred_region
      %14 = vsyncadd [#allocation3], 0
      %s16 = sshll.u32 %s0, 4
      %s17 = int_to_ptr.hbm [resolvable:$true] %s16
      %s18 = sshll.u32 [#allocation2], 4
      %s19 = int_to_ptr.vmem [resolvable:$true] %s18
      %21 = dma.hbm_to_vmem [thread:$0]  %s17, 256, %s19, [#allocation3]
    $region5: #{tpu_custom_call.1} parent=1 // pred_fallthru
      _
    // Predicated region
    $region6: #{tpu_custom_call.1} parent=1 // pred_check
      _
    $region7: #{tpu_custom_call.1} parent=1 // pred_check_branch
      %23 = sbr.rel (0) target = $region9
    $region8: #{tpu_custom_call.1} parent=1 // pred_region
      %25 = vsyncadd [#allocation6], 0
      %s27 = sshll.u32 %s1, 4
      %s28 = int_to_ptr.hbm [resolvable:$true] %s27
      %s29 = sshll.u32 [#allocation5], 4
      %s30 = int_to_ptr.vmem [resolvable:$true] %s29
      %32 = dma.hbm_to_vmem [thread:$0]  %s28, 128, %s30, [#allocation6]
    $region9: #{tpu_custom_call.1} parent=1 // pred_fallthru
      _
    // Predicated region
    $region10: #{tpu_custom_call.1} parent=1 // pred_check
      _
    $region11: #{tpu_custom_call.1} parent=1 // pred_check_branch
      %34 = sbr.rel (0) target = $region13
    $region12: #{tpu_custom_call.1} parent=1 // pred_region
      %36 = vsyncadd [#allocation6], 0
      %s38 = sshll.u32 %s2, 4
      %s39 = int_to_ptr.hbm [resolvable:$true] %s38
      %s40 = sshll.u32 [#allocation7], 4
      %s41 = int_to_ptr.vmem [resolvable:$true] %s40
      %43 = dma.hbm_to_vmem [thread:$0]  %s39, 128, %s41, [#allocation6]
    $region13: #{tpu_custom_call.1} parent=1 // pred_fallthru
      _
    // Predicated region
    $region14: #{tpu_custom_call.1} parent=1 // pred_check
      _
    $region15: #{tpu_custom_call.1} parent=1 // pred_check_branch
      %45 = sbr.rel (0) target = $region17
    $region16: #{tpu_custom_call.1} parent=1 // pred_region
      %47 = dma.done [#allocation3], 256
    $region17: #{tpu_custom_call.1} parent=1 // pred_fallthru
      _
    // Predicated region
    $region18: #{tpu_custom_call.1} parent=1 // pred_check
      _
    $region19: #{tpu_custom_call.1} parent=1 // pred_check_branch
      %49 = sbr.rel (0) target = $region21
    $region20: #{tpu_custom_call.1} parent=1 // pred_region
      %51 = dma.done [#allocation6], 128
    $region21: #{tpu_custom_call.1} parent=1 // pred_fallthru
      _
    // Predicated region
    $region22: #{tpu_custom_call.1} parent=1 // pred_check
      _
    $region23: #{tpu_custom_call.1} parent=1 // pred_check_branch
      %53 = sbr.rel (0) target = $region25
    $region24: #{tpu_custom_call.1} parent=1 // pred_region
      %55 = dma.done [#allocation6], 128
    $region25: #{tpu_custom_call.1} parent=1 // pred_fallthru
      _
    %p56 = scmp.eq.s32.totalorder 0, 0
    // Predicated region
    $region26: #{tpu_custom_call.1} parent=1 // pred_check
      %p57 = pneg %p56
    $region27: #{tpu_custom_call.1} parent=1 // pred_check_branch
      %59 = sbr.rel (%p57) target = $region29
    $region28: #{tpu_custom_call.1} parent=1 // pred_region
      %vm60 = vcmask 0
      %61 = vst.msk [vmem:[#allocation8] sm:$0x1] %vm60, 0.0
    $region29: #{tpu_custom_call.1} parent=1 // pred_fallthru
      _
    %v62 = vld [vmem:[#allocation2] sm:$0xff]
    %v63 = vld [vmem:[#allocation2 + $0x8] sm:$0xff]
    %v64 = vld [vmem:[#allocation5] sm:$0xff]
    %v65 = vld [vmem:[#allocation7] sm:$0xff]
    %s66 = smul.u32 0, 256
    %v67 = vstv %s66
    %v68 = vsub.s32 %v64, %v67
    %vm69 = vcmp.ge.s32.totalorder %v68, 0
    %vm70 = vcmp.lt.s32.totalorder %v68, 256
    %vm71 = vmand %vm69, %vm70
    %v72 = vlaneseq
    %v73 = vand.u32 %v72, 127
    %v74 = vadd.s32 %v73, 128
    %v75 = vperm.slane %v68, 0
    %v76 = vlaneseq
    %v77 = vshrl.u32 %v76, 7
    %79 = vset.pattern.permute.xlu0 %v77
    %80 = vperm.xlu0 %79, %v75
    %v81 = vpop.permute.xlu0 %80
    %v82 = vperm.slane %v68, 1
    %v83 = vlaneseq
    %v84 = vshrl.u32 %v83, 7
    %86 = vset.pattern.permute.xlu0 %v84
    %87 = vperm.xlu0 %86, %v82
    %v88 = vpop.permute.xlu0 %87
    %v89 = vperm.slane %v68, 2
    %v90 = vlaneseq
    %v91 = vshrl.u32 %v90, 7
    %93 = vset.pattern.permute.xlu0 %v91
    %94 = vperm.xlu0 %93, %v89
    %v95 = vpop.permute.xlu0 %94
    %v96 = vperm.slane %v68, 3
    %v97 = vlaneseq
    %v98 = vshrl.u32 %v97, 7
    %100 = vset.pattern.permute.xlu0 %v98
    %101 = vperm.xlu0 %100, %v96
    %v102 = vpop.permute.xlu0 %101
    %v103 = vperm.slane %v68, 4
    %v104 = vlaneseq
    %v105 = vshrl.u32 %v104, 7
    %107 = vset.pattern.permute.xlu0 %v105
    %108 = vperm.xlu0 %107, %v103
    %v109 = vpop.permute.xlu0 %108
    %v110 = vperm.slane %v68, 5
    %v111 = vlaneseq
    %v112 = vshrl.u32 %v111, 7
    %114 = vset.pattern.permute.xlu0 %v112
    %115 = vperm.xlu0 %114, %v110
    %v116 = vpop.permute.xlu0 %115
    %v117 = vperm.slane %v68, 6
    %v118 = vlaneseq
    %v119 = vshrl.u32 %v118, 7
    %121 = vset.pattern.permute.xlu0 %v119
    %122 = vperm.xlu0 %121, %v117
    %v123 = vpop.permute.xlu0 %122
    %v124 = vperm.slane %v68, 7
    %v125 = vlaneseq
    %v126 = vshrl.u32 %v125, 7
    %128 = vset.pattern.permute.xlu0 %v126
    %129 = vperm.xlu0 %128, %v124
    %v130 = vpop.permute.xlu0 %129
    %vm131 = vcmp.eq.s32.totalorder %v73, %v81
    %vm132 = vcmp.eq.s32.totalorder %v74, %v81
    %vm133 = vcmp.eq.s32.totalorder %v73, %v88
    %vm134 = vcmp.eq.s32.totalorder %v74, %v88
    %vm135 = vcmp.eq.s32.totalorder %v73, %v95
    %vm136 = vcmp.eq.s32.totalorder %v74, %v95
    %vm137 = vcmp.eq.s32.totalorder %v73, %v102
    %vm138 = vcmp.eq.s32.totalorder %v74, %v102
    %vm139 = vcmp.eq.s32.totalorder %v73, %v109
    %vm140 = vcmp.eq.s32.totalorder %v74, %v109
    %vm141 = vcmp.eq.s32.totalorder %v73, %v116
    %vm142 = vcmp.eq.s32.totalorder %v74, %v116
    %vm143 = vcmp.eq.s32.totalorder %v73, %v123
    %vm144 = vcmp.eq.s32.totalorder %v74, %v123
    %vm145 = vcmp.eq.s32.totalorder %v73, %v130
    %vm146 = vcmp.eq.s32.totalorder %v74, %v130
    %v149 = vrot.slane %v63, 7
    %vm150 = vcmask 1040384
    %v151 = vsel %vm150, %v62, %v149
    %vm152 = vcmask 1041409
    %v153 = vsel %vm152, %v62, %v149
    %v154 = vrot.slane %v153, 1
    %vm155 = vcmask 1042434
    %v156 = vsel %vm155, %v62, %v149
    %v157 = vrot.slane %v156, 2
    %vm158 = vcmask 1043459
    %v159 = vsel %vm158, %v62, %v149
    %v160 = vrot.slane %v159, 3
    %vm161 = vcmask 1044484
    %v162 = vsel %vm161, %v62, %v149
    %v163 = vrot.slane %v162, 4
    %vm164 = vcmask 1045509
    %v165 = vsel %vm164, %v62, %v149
    %v166 = vrot.slane %v165, 5
    %vm167 = vcmask 1046534
    %v168 = vsel %vm167, %v62, %v149
    %v169 = vrot.slane %v168, 6
    %vm170 = vcmask 1046528
    %v171 = vsel %vm170, %v149, %v62
    %v172 = vrot.slane %v171, 7
    %v173 = vperm.slane %v151, 0
    %v174 = vperm.slane %v151, 1
    %v175 = vperm.slane %v154, 0
    %v176 = vperm.slane %v154, 1
    %v177 = vperm.slane %v157, 0
    %v178 = vperm.slane %v157, 1
    %v179 = vperm.slane %v160, 0
    %v180 = vperm.slane %v160, 1
    %v181 = vperm.slane %v163, 0
    %v182 = vperm.slane %v163, 1
    %v183 = vperm.slane %v166, 0
    %v184 = vperm.slane %v166, 1
    %v185 = vperm.slane %v169, 0
    %v186 = vperm.slane %v169, 1
    %v187 = vperm.slane %v172, 0
    %v188 = vperm.slane %v172, 1
    %v205 = vsel %vm131, %v173, 0.0
    %v206 = vsel %vm132, %v174, 0.0
    %v207 = vsel %vm133, %v175, 0.0
    %v208 = vsel %vm134, %v176, 0.0
    %v209 = vsel %vm135, %v177, 0.0
    %v210 = vsel %vm136, %v178, 0.0
    %v211 = vsel %vm137, %v179, 0.0
    %v212 = vsel %vm138, %v180, 0.0
    %v213 = vsel %vm139, %v181, 0.0
    %v214 = vsel %vm140, %v182, 0.0
    %v215 = vsel %vm141, %v183, 0.0
    %v216 = vsel %vm142, %v184, 0.0
    %v217 = vsel %vm143, %v185, 0.0
    %v218 = vsel %vm144, %v186, 0.0
    %v219 = vsel %vm145, %v187, 0.0
    %v220 = vsel %vm146, %v188, 0.0
    %v221 = vadd.f32 %v205, %v206
    %222 = vadd.xlane.f32.xlu0 %v221
    %v223 = vpop.xlane.xlu0 %222
    %v224 = vadd.f32 %v207, %v208
    %225 = vadd.xlane.f32.xlu0 %v224
    %v226 = vpop.xlane.xlu0 %225
    %v227 = vadd.f32 %v209, %v210
    %228 = vadd.xlane.f32.xlu0 %v227
    %v229 = vpop.xlane.xlu0 %228
    %v230 = vadd.f32 %v211, %v212
    %231 = vadd.xlane.f32.xlu0 %v230
    %v232 = vpop.xlane.xlu0 %231
    %v233 = vadd.f32 %v213, %v214
    %234 = vadd.xlane.f32.xlu0 %v233
    %v235 = vpop.xlane.xlu0 %234
    %v236 = vadd.f32 %v215, %v216
    %237 = vadd.xlane.f32.xlu0 %v236
    %v238 = vpop.xlane.xlu0 %237
    %v239 = vadd.f32 %v217, %v218
    %240 = vadd.xlane.f32.xlu0 %v239
    %v241 = vpop.xlane.xlu0 %240
    %v242 = vadd.f32 %v219, %v220
    %243 = vadd.xlane.f32.xlu0 %v242
    %v244 = vpop.xlane.xlu0 %243
    %v245 = vld [vmem:[#allocation8] sm:$0x1]
    %v247 = vperm.slane %v65, 0
    %v248 = vlaneseq
    %v249 = vshrl.u32 %v248, 7
    %251 = vset.pattern.permute.xlu0 %v249
    %252 = vperm.xlu0 %251, %v247
    %v253 = vpop.permute.xlu0 %252
    %v254 = vperm.slane %v65, 1
    %v255 = vlaneseq
    %v256 = vshrl.u32 %v255, 7
    %258 = vset.pattern.permute.xlu0 %v256
    %259 = vperm.xlu0 %258, %v254
    %v260 = vpop.permute.xlu0 %259
    %v261 = vperm.slane %v65, 2
    %v262 = vlaneseq
    %v263 = vshrl.u32 %v262, 7
    %265 = vset.pattern.permute.xlu0 %v263
    %266 = vperm.xlu0 %265, %v261
    %v267 = vpop.permute.xlu0 %266
    %v268 = vperm.slane %v65, 3
    %v269 = vlaneseq
    %v270 = vshrl.u32 %v269, 7
    %272 = vset.pattern.permute.xlu0 %v270
    %273 = vperm.xlu0 %272, %v268
    %v274 = vpop.permute.xlu0 %273
    %v275 = vperm.slane %v65, 4
    %v276 = vlaneseq
    %v277 = vshrl.u32 %v276, 7
    %279 = vset.pattern.permute.xlu0 %v277
    %280 = vperm.xlu0 %279, %v275
    %v281 = vpop.permute.xlu0 %280
    %v282 = vperm.slane %v65, 5
    %v283 = vlaneseq
    %v284 = vshrl.u32 %v283, 7
    %286 = vset.pattern.permute.xlu0 %v284
    %287 = vperm.xlu0 %286, %v282
    %v288 = vpop.permute.xlu0 %287
    %v289 = vperm.slane %v65, 6
    %v290 = vlaneseq
    %v291 = vshrl.u32 %v290, 7
    %293 = vset.pattern.permute.xlu0 %v291
    %294 = vperm.xlu0 %293, %v289
    %v295 = vpop.permute.xlu0 %294
    %v296 = vperm.slane %v65, 7
    %v297 = vlaneseq
    %v298 = vshrl.u32 %v297, 7
    %300 = vset.pattern.permute.xlu0 %v298
    %301 = vperm.xlu0 %300, %v296
    %v302 = vpop.permute.xlu0 %301
    %v311 = vsub.f32 %v223, %v253
    %v312 = vsub.f32 %v226, %v260
    %v313 = vsub.f32 %v229, %v267
    %v314 = vsub.f32 %v232, %v274
    %v315 = vsub.f32 %v235, %v281
    %v316 = vsub.f32 %v238, %v288
    %v317 = vsub.f32 %v241, %v295
    %v318 = vsub.f32 %v244, %v302
    %v319 = vand.u32 2147483647, %v311
    %v320 = vand.u32 2147483647, %v312
    %v321 = vand.u32 2147483647, %v313
    %v322 = vand.u32 2147483647, %v314
    %v323 = vand.u32 2147483647, %v315
    %v324 = vand.u32 2147483647, %v316
    %v325 = vand.u32 2147483647, %v317
    %v326 = vand.u32 2147483647, %v318
    %335 = vset.pattern.permute.xlu0 0
    %336 = vperm.xlu0 %335, %v319
    %v337 = vpop.permute.xlu0 %336
    %338 = vset.pattern.permute.xlu0 0
    %339 = vperm.xlu0 %338, %v320
    %v340 = vpop.permute.xlu0 %339
    %341 = vset.pattern.permute.xlu0 0
    %342 = vperm.xlu0 %341, %v321
    %v343 = vpop.permute.xlu0 %342
    %344 = vset.pattern.permute.xlu0 0
    %345 = vperm.xlu0 %344, %v322
    %v346 = vpop.permute.xlu0 %345
    %347 = vset.pattern.permute.xlu0 0
    %348 = vperm.xlu0 %347, %v323
    %v349 = vpop.permute.xlu0 %348
    %350 = vset.pattern.permute.xlu0 0
    %351 = vperm.xlu0 %350, %v324
    %v352 = vpop.permute.xlu0 %351
    %353 = vset.pattern.permute.xlu0 0
    %354 = vperm.xlu0 %353, %v325
    %v355 = vpop.permute.xlu0 %354
    %356 = vset.pattern.permute.xlu0 0
    %357 = vperm.xlu0 %356, %v326
    %v358 = vpop.permute.xlu0 %357
    %v359 = vperm.slane %v337, %v73
    %v360 = vperm.slane %v340, %v73
    %v361 = vperm.slane %v343, %v73
    %v362 = vperm.slane %v346, %v73
    %v363 = vperm.slane %v349, %v73
    %v364 = vperm.slane %v352, %v73
    %v365 = vperm.slane %v355, %v73
    %v366 = vperm.slane %v358, %v73
    %v367 = vsel %vm152, %v360, %v359
    %v368 = vsel %vm155, %v361, %v367
    %v369 = vsel %vm158, %v362, %v368
    %v370 = vsel %vm161, %v363, %v369
    %v371 = vsel %vm164, %v364, %v370
    %v372 = vsel %vm167, %v365, %v371
    %vm373 = vcmask 1047559
    %v374 = vsel %vm373, %v366, %v372
    %v376 = vsel %vm71, %v374, 0.0
    %vm377 = vcmask 64512
    %v378 = vsel %vm377, %v376, 0.0
    %379 = vadd.xlane.f32.xlu0 %v378
    %v380 = vpop.xlane.xlu0 %379
    %v381 = vrot.slane %v380, 4
    %v382 = vadd.f32 %v380, %v381
    %v383 = vrot.slane %v382, 2
    %v384 = vadd.f32 %v382, %v383
    %v385 = vrot.slane %v384, 1
    %v386 = vadd.f32 %v384, %v385
    %s387 = vtos %v386
    %v388 = vstv %s387
    %v389 = vadd.f32 %v245, %v388
    %vm390 = vcmask 0
    %391 = vst.msk [vmem:[#allocation8] sm:$0x1] %vm390, %v389
    // Predicated region
    $region30: #{tpu_custom_call.1} parent=1 // pred_check
      _
    $region31: #{tpu_custom_call.1} parent=1 // pred_check_branch
      %393 = sbr.rel (0) target = $region33
    $region32: #{tpu_custom_call.1} parent=1 // pred_region
      %395 = vsyncadd [#allocation4], 0
      %s397 = sshll.u32 [#allocation8], 4
      %s398 = int_to_ptr.vmem [resolvable:$true] %s397
      %s399 = sshll.u32 %s3, 4
      %s400 = int_to_ptr.hbm [resolvable:$true] %s399
      %402 = dma.vmem_to_hbm [thread:$0]  %s398, 16, %s400, [#allocation4]
    $region33: #{tpu_custom_call.1} parent=1 // pred_fallthru
      _
    // Predicated region
    $region34: #{tpu_custom_call.1} parent=1 // pred_check
      _
    $region35: #{tpu_custom_call.1} parent=1 // pred_check_branch
      %404 = sbr.rel (0) target = $region37
    $region36: #{tpu_custom_call.1} parent=1 // pred_region
      %406 = dma.done [#allocation4], 16
    $region37: #{tpu_custom_call.1} parent=1 // pred_fallthru
      _
    %407 = vsyncpa [#allocation3], 1
    %408 = vsyncpa [#allocation6], 1
    %409 = vsyncpa [#allocation4], 1

</llo_original>
